<compile_context>
chip_gen: v5e
topology: v5e:2x2
jax: 0.10.0
libtpu: 0.0.40
codegen_flags: <defaults>
</compile_context>

<pallas_src>
import functools

import jax
import jax.numpy as jnp
from jax.experimental import pallas as pl
from jax.experimental.pallas import tpu as pltpu


def _round_up(x, m):
    return ((x + m - 1) // m) * m


_MIB = 1024 * 1024
_RESIDENT_BUDGET = 40 * _MIB   # max estimated footprint allowed when keeping the
                               # dense operand resident in VMEM (safe on v7x 64 MiB)
_VMEM_CAP = 56 * _MIB          # never ask for more scoped VMEM than this


def _vmem_limit(footprint_bytes):
    # generous headroom above the estimate, floor at 32 MiB, capped below v7x physical
    return int(min(_VMEM_CAP, max(32 * _MIB, 2 * footprint_bytes)))


# ---------------------------------------------------------------------------
# Kernel 1: layer-1 propagate (A_hat @ X) with fused feature transforms
#   HW2 = relu((A_hat @ X) @ W1 + b1) @ W2
# ---------------------------------------------------------------------------
def _layer1_kernel(a_ref, x_ref, b1_ref, w1_ref, w2_ref, hw2_ref, acc_ref, *,
                   tk, x_resident):
    k = pl.program_id(1)

    @pl.when(k == 0)
    def _():
        acc_ref[...] = jnp.zeros_like(acc_ref)

    if x_resident:
        start = pl.multiple_of(k * tk, tk)
        x_blk = x_ref[pl.ds(start, tk), :]        # slice the resident VMEM operand
    else:
        x_blk = x_ref[...]

    acc_ref[...] += jnp.dot(a_ref[...], x_blk, preferred_element_type=jnp.float32)

    @pl.when(k == pl.num_programs(1) - 1)
    def _():
        # conv1: (A_hat @ X) @ W1 + b1  ==  A_hat @ (X @ W1) + b1, then ReLU (f32)
        h = jnp.dot(acc_ref[...].astype(w1_ref.dtype), w1_ref[...],
                    preferred_element_type=jnp.float32)
        h = jnp.maximum(h + b1_ref[...], 0.0)
        # TODO(synk): F.dropout(training=self.training) is identity in eval mode; no-op here.
        hw2_ref[...] = jnp.dot(h.astype(w2_ref.dtype), w2_ref[...],
                               preferred_element_type=jnp.float32).astype(hw2_ref.dtype)


# ---------------------------------------------------------------------------
# Kernel 2: layer-2 propagate + masked, numerically-stable row softmax
#   P = softmax(A_hat @ HW2 + b2)   (padded class lanes masked out)
# ---------------------------------------------------------------------------
def _layer2_kernel(a_ref, hw2_ref, b2_ref, o_ref, acc_ref, *,
                   tk, hw2_resident, num_classes):
    k = pl.program_id(1)

    @pl.when(k == 0)
    def _():
        acc_ref[...] = jnp.zeros_like(acc_ref)

    if hw2_resident:
        start = pl.multiple_of(k * tk, tk)
        h_blk = hw2_ref[pl.ds(start, tk), :]
    else:
        h_blk = hw2_ref[...]

    acc_ref[...] += jnp.dot(a_ref[...], h_blk, preferred_element_type=jnp.float32)

    @pl.when(k == pl.num_programs(1) - 1)
    def _():
        logits = acc_ref[...] + b2_ref[...]
        lane = jax.lax.broadcasted_iota(jnp.int32, logits.shape, 1)
        logits = jnp.where(lane < num_classes, logits, jnp.finfo(jnp.float32).min)
        m = jnp.max(logits, axis=1, keepdims=True)
        e = jnp.exp(logits - m)
        s = jnp.sum(e, axis=1, keepdims=True)
        r = pl.reciprocal(s, approx=True)          # EUP reciprocal ...
        r = r * (2.0 - s * r)                      # ... plus one Newton-Raphson step
        o_ref[...] = e * r


def gcn_classification_forward(x, edge_index, edge_weight, w1, b1, w2, b2, *, tile=512):
    """x: [N, F] f32; edge_index: [2, E] int32 (src, dst); edge_weight: [E] f32."""
    n, f_in = x.shape
    num_classes = w2.shape[1]

    f32, bf16 = jnp.float32, jnp.bfloat16

    # ---- padded sizes: rows to >=128 / tile-friendly, feat/class to 128 lanes
    n_pad = _round_up(n, 128)
    f_pad = _round_up(f_in, 128)
    c_pad = _round_up(num_classes, 128)

    # reduction (k) tile: largest of (tile, 256, 128) that divides n_pad
    tk = next(t for t in (tile, 256, 128) if n_pad % t == 0)
    # row tile: same size, but guarantee >= 2 row tiles (v7x megacore sharding)
    tm = tk
    while (n_pad // tm) < 2 and tm > 64:
        tm //= 2
    n_row_tiles = n_pad // tm
    n_k_tiles = n_pad // tk

    # ---- glue (plain JAX): dense symmetric-normalized adjacency w/ self loops
    # A_hat[i, j] = d_i^{-1/2} * w_{j->i} * d_j^{-1/2}, matching torch_geometric GCNConv.
    # TODO(synk): for large sparse graphs, replace the dense A_hat with block-sparse
    # tiles gathered via scalar-prefetched block indices instead of N^2 dense traffic.
    src, dst = edge_index[0], edge_index[1]
    loop = jnp.arange(n, dtype=src.dtype)
    src = jnp.concatenate([src, loop])
    dst = jnp.concatenate([dst, loop])
    w = jnp.concatenate([edge_weight.astype(f32), jnp.ones((n,), f32)])
    deg = jnp.zeros((n,), f32).at[dst].add(w)
    dinv = jnp.where(deg > 0, jax.lax.rsqrt(deg), 0.0)
    norm = dinv[src] * w * dinv[dst]
    a_hat = jnp.zeros((n_pad, n_pad), f32).at[dst, src].add(norm).astype(bf16)
    # TODO(synk): on v7x, an fp8 (e4m3) A_hat halves the dominant HBM term; validate accuracy first.

    # ---- zero-padded operands: bf16 into the MXU, f32 biases
    x_p = jnp.zeros((n_pad, f_pad), f32).at[:n, :f_in].set(x).astype(bf16)
    w1_p = jnp.zeros((f_pad, f_pad), f32).at[:f_in, :f_in].set(w1).astype(bf16)
    b1_p = jnp.zeros((1, f_pad), f32).at[0, :f_in].set(b1)
    w2_p = jnp.zeros((f_pad, c_pad), f32).at[:f_in, :num_classes].set(w2).astype(bf16)
    b2_p = jnp.zeros((1, c_pad), f32).at[0, :num_classes].set(b2)

    # A_hat stream buffering: cover the long finalize iteration when the k-loop is deep
    a_bufs = 3 if n_k_tiles >= 3 else 2
    a_spec_kwargs = {"pipeline_mode": pl.Buffered(3)} if a_bufs == 3 else {}

    # ---- VMEM footprints & residency decisions (double-buffered unless noted) ----
    def _l1_footprint(resident):
        return (a_bufs * tm * tk * 2                       # A_hat tiles (bf16)
                + 2 * (n_pad if resident else tk) * f_pad * 2   # X operand (bf16)
                + 2 * 1 * f_pad * 4                         # b1
                + 2 * f_pad * f_pad * 2                     # W1
                + 2 * f_pad * c_pad * 2                     # W2
                + 2 * tm * c_pad * 2                        # HW2 output (bf16)
                + tm * f_pad * 4)                           # f32 accumulator

    def _l2_footprint(resident):
        return (a_bufs * tm * tk * 2
                + 2 * (n_pad if resident else tk) * c_pad * 2   # HW2 operand (bf16)
                + 2 * 1 * c_pad * 4                         # b2
                + 2 * tm * c_pad * 4                        # probs output (f32)
                + tm * c_pad * 4)                           # f32 accumulator

    x_resident = _l1_footprint(True) <= _RESIDENT_BUDGET
    hw2_resident = _l2_footprint(True) <= _RESIDENT_BUDGET
    vmem1 = _vmem_limit(_l1_footprint(x_resident))
    vmem2 = _vmem_limit(_l2_footprint(hw2_resident))

    if x_resident:
        x_spec = pl.BlockSpec((n_pad, f_pad), lambda i, k: (0, 0))
    else:
        x_spec = pl.BlockSpec((tk, f_pad), lambda i, k: (k, 0))
    if hw2_resident:
        hw2_spec = pl.BlockSpec((n_pad, c_pad), lambda i, k: (0, 0))
    else:
        hw2_spec = pl.BlockSpec((tk, c_pad), lambda i, k: (k, 0))

    # ---- kernel 1: HW2 = relu((A_hat @ X) @ W1 + b1) @ W2 ----
    hw2 = pl.pallas_call(
        functools.partial(_layer1_kernel, tk=tk, x_resident=x_resident),
        out_shape=jax.ShapeDtypeStruct((n_pad, c_pad), bf16),
        grid_spec=pltpu.PrefetchScalarGridSpec(
            num_scalar_prefetch=0,
            grid=(n_row_tiles, n_k_tiles),
            in_specs=[
                pl.BlockSpec((tm, tk), lambda i, k: (i, k), **a_spec_kwargs),
                x_spec,
                pl.BlockSpec((1, f_pad), lambda i, k: (0, 0)),
                pl.BlockSpec((f_pad, f_pad), lambda i, k: (0, 0)),
                pl.BlockSpec((f_pad, c_pad), lambda i, k: (0, 0)),
            ],
            out_specs=pl.BlockSpec((tm, c_pad), lambda i, k: (i, 0)),
            scratch_shapes=[pltpu.VMEM((tm, f_pad), f32)],
        ),
        compiler_params=pltpu.CompilerParams(
            dimension_semantics=("parallel", "arbitrary"),
            vmem_limit_bytes=vmem1,
        ),
        cost_estimate=pl.CostEstimate(
            flops=2 * n_pad * n_pad * f_pad
            + 2 * n_pad * f_pad * f_pad
            + 2 * n_pad * f_pad * c_pad,
            transcendentals=0,
            bytes_accessed=2
            * (n_pad * n_pad + n_pad * f_pad + f_pad * f_pad + f_pad * c_pad
               + n_pad * c_pad),
        ),
    )(a_hat, x_p, b1_p, w1_p, w2_p)

    # ---- kernel 2: probs = softmax(A_hat @ HW2 + b2) over real class lanes ----
    probs = pl.pallas_call(
        functools.partial(_layer2_kernel, tk=tk, hw2_resident=hw2_resident,
                          num_classes=num_classes),
        out_shape=jax.ShapeDtypeStruct((n_pad, c_pad), f32),
        grid_spec=pltpu.PrefetchScalarGridSpec(
            num_scalar_prefetch=0,
            grid=(n_row_tiles, n_k_tiles),
            in_specs=[
                pl.BlockSpec((tm, tk), lambda i, k: (i, k), **a_spec_kwargs),
                hw2_spec,
                pl.BlockSpec((1, c_pad), lambda i, k: (0, 0)),
            ],
            out_specs=pl.BlockSpec((tm, c_pad), lambda i, k: (i, 0)),
            scratch_shapes=[pltpu.VMEM((tm, c_pad), f32)],
        ),
        compiler_params=pltpu.CompilerParams(
            dimension_semantics=("parallel", "arbitrary"),
            vmem_limit_bytes=vmem2,
        ),
        cost_estimate=pl.CostEstimate(
            flops=2 * n_pad * n_pad * c_pad,
            transcendentals=n_pad * c_pad,
            bytes_accessed=2 * (n_pad * n_pad + n_pad * c_pad) + 4 * n_pad * c_pad,
        ),
    )(a_hat, hw2, b2_p)

    # strip row / class padding
    return probs[:n, :num_classes]


if __name__ == "__main__":
    N = 16            # number of nodes
    F_IN = 32         # in_channels (node feature length)
    NUM_CLASSES = 8
    E = 24            # number of (directed) edges

    key = jax.random.PRNGKey(0)
    k_x, k_ei, k_ew, k_w1, k_w2 = jax.random.split(key, 5)

    x = jax.random.normal(k_x, (N, F_IN), dtype=jnp.float32)
    edge_index = jax.random.randint(k_ei, (2, E), 0, N, dtype=jnp.int32)
    edge_weight = jax.random.uniform(k_ew, (E,), dtype=jnp.float32)

    # deterministic Glorot-style parameter init (GCNConv: weight [in, out], bias [out])
    w1 = jax.random.normal(k_w1, (F_IN, F_IN), dtype=jnp.float32) * (2.0 / (F_IN + F_IN)) ** 0.5
    b1 = jnp.zeros((F_IN,), dtype=jnp.float32)
    w2 = jax.random.normal(k_w2, (F_IN, NUM_CLASSES), dtype=jnp.float32) * (2.0 / (F_IN + NUM_CLASSES)) ** 0.5
    b2 = jnp.zeros((NUM_CLASSES,), dtype=jnp.float32)

    out = gcn_classification_forward(x, edge_index, edge_weight, w1, b1, w2, b2)
    out = jax.block_until_ready(out)

    assert out.shape == (N, NUM_CLASSES)
    # rows of a softmax must sum to ~1 (NR-refined reciprocal => tight in f32)
    assert bool(jnp.allclose(jnp.sum(out, axis=1), 1.0, atol=1e-3))
    assert bool(jnp.all(jnp.isfinite(out)))
    assert bool(jnp.all(out >= 0.0))
    print("KERNEL_OK")
</pallas_src>

<mosaic_0001>
module attributes {stable_mosaic.version = 11 : i64} {
  func.func @_layer1_kernel(%arg0: i32, %arg1: i32, %arg2: memref<64x128xbf16, #tpu.memory_space<vmem>>, %arg3: memref<128x128xbf16, #tpu.memory_space<vmem>>, %arg4: memref<1x128xf32, #tpu.memory_space<vmem>>, %arg5: memref<128x128xbf16, #tpu.memory_space<vmem>>, %arg6: memref<128x128xbf16, #tpu.memory_space<vmem>>, %arg7: memref<64x128xbf16, #tpu.memory_space<vmem>>, %arg8: memref<64x128xf32, #tpu.memory_space<vmem>>) attributes {dimension_semantics = [#tpu.dimension_semantics<parallel>, #tpu.dimension_semantics<arbitrary>], iteration_bounds = array<i64: 2, 1>, scalar_prefetch = 0 : i64, scratch_operands = 1 : i64, tpu.core_type = #tpu.core_type<tc>, window_params = [{transform_indices = @transform_0, window_bounds = array<i64: 64, 128>}, {pipeline_mode = #tpu.pipeline_mode<synchronous>, transform_indices = @transform_1, window_bounds = array<i64: 128, 128>}, {pipeline_mode = #tpu.pipeline_mode<synchronous>, transform_indices = @transform_2, window_bounds = array<i64: 1, 128>}, {pipeline_mode = #tpu.pipeline_mode<synchronous>, transform_indices = @transform_3, window_bounds = array<i64: 128, 128>}, {pipeline_mode = #tpu.pipeline_mode<synchronous>, transform_indices = @transform_4, window_bounds = array<i64: 128, 128>}, {transform_indices = @transform_5, window_bounds = array<i64: 64, 128>}]} {
    %c0_i32 = arith.constant 0 : i32
    %0 = arith.cmpi eq, %arg1, %c0_i32 : i32
    %1 = arith.extui %0 : i1 to i32
    %c0_i32_0 = arith.constant 0 : i32
    %2 = arith.cmpi ne, %1, %c0_i32_0 : i32
    scf.if %2 {
      %cst_9 = arith.constant 0.000000e+00 : f32
      %15 = vector.broadcast %cst_9 : f32 to vector<64x128xf32>
      %c0_10 = arith.constant 0 : index
      %c0_11 = arith.constant 0 : index
      %16 = vector.load %arg8[%c0_10, %c0_11] : memref<64x128xf32, #tpu.memory_space<vmem>>, vector<64x128xf32>
      tpu.vector_store %arg8[%c0_10, %c0_11], %15 {strides = array<i32>} : memref<64x128xf32, #tpu.memory_space<vmem>>, vector<64x128xf32>,
    } else {
    }
    %c128_i32 = arith.constant 128 : i32
    %3 = arith.muli %arg1, %c128_i32 : i32
    %4 = tpu.assume_multiple %3, 128 : i32
    %5 = arith.index_cast %4 : i32 to index
    %c0 = arith.constant 0 : index
    %6 = vector.load %arg3[%5, %c0] : memref<128x128xbf16, #tpu.memory_space<vmem>>, vector<128x128xbf16>
    %c0_1 = arith.constant 0 : index
    %c0_2 = arith.constant 0 : index
    %7 = vector.load %arg8[%c0_1, %c0_2] : memref<64x128xf32, #tpu.memory_space<vmem>>, vector<64x128xf32>
    %c0_3 = arith.constant 0 : index
    %c0_4 = arith.constant 0 : index
    %8 = vector.load %arg2[%c0_3, %c0_4] : memref<64x128xbf16, #tpu.memory_space<vmem>>, vector<64x128xbf16>
    %cst = arith.constant dense<0.000000e+00> : vector<64x128xf32>
    %9 = tpu.matmul %8, %6, %cst {dimension_numbers = #tpu.dot_dimension_numbers<[1], [0], [0], [1], [0, 0, 1, 1], [], []>} : vector<64x128xbf16>, vector<128x128xbf16>, vector<64x128xf32> -> vector<64x128xf32>
    %10 = arith.addf %7, %9 : vector<64x128xf32>
    %c0_5 = arith.constant 0 : index
    %c0_6 = arith.constant 0 : index
    %11 = vector.load %arg8[%c0_5, %c0_6] : memref<64x128xf32, #tpu.memory_space<vmem>>, vector<64x128xf32>
    tpu.vector_store %arg8[%c0_5, %c0_6], %10 {strides = array<i32>} : memref<64x128xf32, #tpu.memory_space<vmem>>, vector<64x128xf32>,
    %c0_i32_7 = arith.constant 0 : i32
    %12 = arith.cmpi eq, %arg1, %c0_i32_7 : i32
    %13 = arith.extui %12 : i1 to i32
    %c0_i32_8 = arith.constant 0 : i32
    %14 = arith.cmpi ne, %13, %c0_i32_8 : i32
    scf.if %14 {
      %c0_9 = arith.constant 0 : index
      %c0_10 = arith.constant 0 : index
      %15 = vector.load %arg8[%c0_9, %c0_10] : memref<64x128xf32, #tpu.memory_space<vmem>>, vector<64x128xf32>
      %16 = arith.truncf %15 : vector<64x128xf32> to vector<64x128xbf16>
      %c0_11 = arith.constant 0 : index
      %c0_12 = arith.constant 0 : index
      %17 = vector.load %arg5[%c0_11, %c0_12] : memref<128x128xbf16, #tpu.memory_space<vmem>>, vector<128x128xbf16>
      %cst_13 = arith.constant dense<0.000000e+00> : vector<64x128xf32>
      %18 = tpu.matmul %16, %17, %cst_13 {dimension_numbers = #tpu.dot_dimension_numbers<[1], [0], [0], [1], [0, 0, 1, 1], [], []>} : vector<64x128xbf16>, vector<128x128xbf16>, vector<64x128xf32> -> vector<64x128xf32>
      %c0_14 = arith.constant 0 : index
      %c0_15 = arith.constant 0 : index
      %19 = vector.load %arg4[%c0_14, %c0_15] : memref<1x128xf32, #tpu.memory_space<vmem>>, vector<1x128xf32>
      %20 = vector.broadcast %19 : vector<1x128xf32> to vector<64x128xf32>
      %21 = arith.addf %18, %20 : vector<64x128xf32>
      %cst_16 = arith.constant 0.000000e+00 : f32
      %22 = vector.broadcast %cst_16 : f32 to vector<64x128xf32>
      %23 = arith.maximumf %21, %22 : vector<64x128xf32>
      %24 = arith.truncf %23 : vector<64x128xf32> to vector<64x128xbf16>
      %c0_17 = arith.constant 0 : index
      %c0_18 = arith.constant 0 : index
      %25 = vector.load %arg6[%c0_17, %c0_18] : memref<128x128xbf16, #tpu.memory_space<vmem>>, vector<128x128xbf16>
      %cst_19 = arith.constant dense<0.000000e+00> : vector<64x128xf32>
      %26 = tpu.matmul %24, %25, %cst_19 {dimension_numbers = #tpu.dot_dimension_numbers<[1], [0], [0], [1], [0, 0, 1, 1], [], []>} : vector<64x128xbf16>, vector<128x128xbf16>, vector<64x128xf32> -> vector<64x128xf32>
      %27 = arith.truncf %26 : vector<64x128xf32> to vector<64x128xbf16>
      %c0_20 = arith.constant 0 : index
      %c0_21 = arith.constant 0 : index
      %28 = vector.load %arg7[%c0_20, %c0_21] : memref<64x128xbf16, #tpu.memory_space<vmem>>, vector<64x128xbf16>
      tpu.vector_store %arg7[%c0_20, %c0_21], %27 {strides = array<i32>} : memref<64x128xbf16, #tpu.memory_space<vmem>>, vector<64x128xbf16>,
    } else {
    }
    return
  }
  func.func @transform_0(%arg0: i32, %arg1: i32) -> (i32, i32) {
    %c0_i32 = arith.constant 0 : i32
    return %arg0, %arg1 : i32, i32
  }
  func.func @transform_1(%arg0: i32, %arg1: i32) -> (i32, i32) {
    %c0_i32 = arith.constant 0 : i32
    %c0_i32_0 = arith.constant 0 : i32
    %c0_i32_1 = arith.constant 0 : i32
    return %c0_i32, %c0_i32_0 : i32, i32
  }
  func.func @transform_2(%arg0: i32, %arg1: i32) -> (i32, i32) {
    %c0_i32 = arith.constant 0 : i32
    %c0_i32_0 = arith.constant 0 : i32
    %c0_i32_1 = arith.constant 0 : i32
    return %c0_i32, %c0_i32_0 : i32, i32
  }
  func.func @transform_3(%arg0: i32, %arg1: i32) -> (i32, i32) {
    %c0_i32 = arith.constant 0 : i32
    %c0_i32_0 = arith.constant 0 : i32
    %c0_i32_1 = arith.constant 0 : i32
    return %c0_i32, %c0_i32_0 : i32, i32
  }
  func.func @transform_4(%arg0: i32, %arg1: i32) -> (i32, i32) {
    %c0_i32 = arith.constant 0 : i32
    %c0_i32_0 = arith.constant 0 : i32
    %c0_i32_1 = arith.constant 0 : i32
    return %c0_i32, %c0_i32_0 : i32, i32
  }
  func.func @transform_5(%arg0: i32, %arg1: i32) -> (i32, i32) {
    %c0_i32 = arith.constant 0 : i32
    %c0_i32_0 = arith.constant 0 : i32
    return %arg0, %c0_i32 : i32, i32
  }
}

</mosaic_0001>

<llo_original>
// kernel: tpu_custom_call.1
$region0: #{tpu_custom_call.1}
  #allocation0 [shape = 'u32[]', space=smem, size = 0x4, offset = 0x4, fixed_abs, tag = 'smem constant byte address 0x4 - core index']
  #allocation1 [shape = 'u32[72,128]{1,0:T(1,128)}', space=vmem, size = 0x9000, scoped, tag = 'internal scratch']
  #allocation2 [shape = 'f32[64,128]{1,0:T(8,128)}', space=vmem, size = 0x8000, scoped, tag = 'scratch operand']
  %s0 = inlined_call_operand.hbm [shape: bf16[128,128], index: 0, kind: input, shape index: {}]
  %s1 = inlined_call_operand.hbm [shape: bf16[128,128], index: 1, kind: input, shape index: {}]
  %s2 = inlined_call_operand.vmem [shape: f32[1,128], index: 2, kind: input, shape index: {}]
  %s3 = inlined_call_operand.hbm [shape: bf16[128,128], index: 3, kind: input, shape index: {}]
  %s4 = inlined_call_operand.hbm [shape: bf16[128,128], index: 4, kind: input, shape index: {}]
  %s5 = inlined_call_operand.hbm [shape: bf16[128,128], index: 5, kind: output, shape index: {}]
  %s6 = sld [smem:[#allocation0]]
  $region77: #{tpu_custom_call.1} parent=0
    _
  %s8 = ssub.s32 1, %s6
  %s9 = scalar_select 0, %s8, %s6
  $region1: #{tpu_custom_call.1} parent=0
    #allocation3 [shape = 'u8[32768]{0}', space=vmem, size = 0x8000, scoped, tag = 'input window, operand 0']
    #allocation4 [shape = 's32[2]{0}', space=sflag, size = 0x8, scoped, tag = 'scoped memory for tpu_custom_call.1']
    #allocation5 [shape = 's32[2]{0}', space=sflag, size = 0x8, scoped, tag = 'scoped memory for tpu_custom_call.1']
    #allocation6 [shape = 'u8[32768]{0}', space=vmem, size = 0x8000, scoped, tag = 'input window, operand 1, single buffered']
    #allocation7 [shape = 's32[1]{0}', space=sflag, size = 0x4, scoped, tag = 'scoped memory for tpu_custom_call.1']
    #allocation8 [shape = 'u8[32768]{0}', space=vmem, size = 0x8000, scoped, tag = 'input window, operand 3, single buffered']
    #allocation9 [shape = 'u8[32768]{0}', space=vmem, size = 0x8000, scoped, tag = 'input window, operand 4, single buffered']
    #allocation10 [shape = 's32[1]{0}', space=sflag, size = 0x4, scoped, tag = 'scoped memory for tpu_custom_call.1']
    #allocation11 [shape = 'u8[32768]{0}', space=vmem, size = 0x8000, scoped, tag = 'output window, operand 0']
    %10 = vsyncpa [#allocation4], 0
    %s11 = scalar_lea.sflag [#allocation4], 1
    %12 = vsyncpa %s11, 0
    %13 = vsyncpa [#allocation7], 0
    %14 = vsyncpa [#allocation10], 0
    %15 = vsyncpa [#allocation5], 0
    %s16 = scalar_lea.sflag [#allocation5], 1
    %17 = vsyncpa %s16, 0
    loop: start=0, step=1, limit=4
    $region2: #{tpu_custom_call.1} parent=1 // loop_pre_header
      _
    $region3: #{tpu_custom_call.1} parent=1 // loop_header
      %s19 = sphi 0, %s23
      %p20 = scmp.ge.s32.totalorder %s19, 4
      %s26 = sphi 0, %s38
      %s27 = sphi 0, %s34
      %s28 = sphi 0, %s26
      %s29 = sphi 0, %s27
      %s30 = sphi 0, %s28
      %s31 = sphi 0, %s29
      %s43 = sphi 0, %s45
      %s46 = sphi 0, %s43
      %s47 = sphi 0, %s46
      %s63 = sphi 0, %s47
      %s67 = sphi 0, %s67
      %s69 = sphi 0, %s67
      %s70 = sphi 0, %s69
      %s84 = sphi 0, %s70
      %s88 = sphi 0, %s88
      %s90 = sphi 0, %s88
      %s91 = sphi 0, %s90
      %s105 = sphi 0, %s91
      %s109 = sphi 0, %s109
      %s111 = sphi 0, %s109
      %s112 = sphi 0, %s111
      %s126 = sphi 0, %s112
      %s130 = sphi 0, %s130
      %s132 = sphi 0, %s130
      %s133 = sphi 0, %s132
      %s147 = sphi 0, %s133
      %s153 = sphi 0, %s155
      %s156 = sphi 0, %s153
      %s157 = sphi 0, %s156
      %s173 = sphi 0, %s157
    $region4: #{tpu_custom_call.1} parent=1 // loop_header_branch
      %22 = sbr.rel (%p20) target = $region8
    $region5: #{tpu_custom_call.1} parent=1 // loop_body
      %s24 = ssub.s32 %s19, 1
      %s25 = ssub.s32 %s19, 2
      %s32 = sadd.s32 1, %s27
      %p33 = scmp.ge.s32.totalorder %s32, 1
      %s34 = scalar_select %p33, 0, %s32
      %s35 = sadd.s32 1, %s26
      %s36 = scalar_select %p33, %s35, %s26
      %p37 = scmp.ge.s32.totalorder %s36, 2
      %s38 = scalar_select %p37, 0, %s36
      %s39 = ssub.s32 %s26, %s38
      %s40 = ssub.s32 %s27, %s34
      %s41 = sor.u32 %s39, %s40
      %p42 = scmp.eq.s32.totalorder %s41, 0
      %s44 = sadd.s32 %s43, 1
      %s45 = scalar_select %p42, %s43, %s44
      %p48 = pneg %p42
      %p49 = scmp.eq.s32.totalorder %s19, 1
      %p50 = por %p48, %p49
      %p51 = scmp.ne.s32.totalorder %s43, %s46
      %p52 = scmp.eq.s32.totalorder %s19, 0
      %p53 = por %p51, %p52
      %p54 = scmp.ne.s32.totalorder %s43, %s46
      %p55 = scmp.eq.s32.totalorder %s24, 1
      %p56 = por %p54, %p55
      %p57 = scmp.ne.s32.totalorder %s46, %s47
      %p58 = scmp.eq.s32.totalorder %s24, 0
      %p59 = por %p57, %p58
      %p60 = scmp.ne.s32.totalorder %s46, %s47
      %p61 = scmp.eq.s32.totalorder %s25, 1
      %p62 = por %p60, %p61
      %p64 = scmp.ne.s32.totalorder %s47, %s63
      %p65 = scmp.eq.s32.totalorder %s25, 0
      %p66 = por %p64, %p65
      %s68 = sadd.s32 %s67, 1
      %p71 = scmp.eq.s32.totalorder %s19, 1
      %p72 = scmp.ne.s32.totalorder %s67, %s69
      %p73 = scmp.eq.s32.totalorder %s19, 0
      %p74 = por %p72, %p73
      %p75 = scmp.ne.s32.totalorder %s67, %s69
      %p76 = scmp.eq.s32.totalorder %s24, 1
      %p77 = por %p75, %p76
      %p78 = scmp.ne.s32.totalorder %s69, %s70
      %p79 = scmp.eq.s32.totalorder %s24, 0
      %p80 = por %p78, %p79
      %p81 = scmp.ne.s32.totalorder %s69, %s70
      %p82 = scmp.eq.s32.totalorder %s25, 1
      %p83 = por %p81, %p82
      %p85 = scmp.ne.s32.totalorder %s70, %s84
      %p86 = scmp.eq.s32.totalorder %s25, 0
      %p87 = por %p85, %p86
      %s89 = sadd.s32 %s88, 1
      %p92 = scmp.eq.s32.totalorder %s19, 1
      %p93 = scmp.ne.s32.totalorder %s88, %s90
      %p94 = scmp.eq.s32.totalorder %s19, 0
      %p95 = por %p93, %p94
      %p96 = scmp.ne.s32.totalorder %s88, %s90
      %p97 = scmp.eq.s32.totalorder %s24, 1
      %p98 = por %p96, %p97
      %p99 = scmp.ne.s32.totalorder %s90, %s91
      %p100 = scmp.eq.s32.totalorder %s24, 0
      %p101 = por %p99, %p100
      %p102 = scmp.ne.s32.totalorder %s90, %s91
      %p103 = scmp.eq.s32.totalorder %s25, 1
      %p104 = por %p102, %p103
      %p106 = scmp.ne.s32.totalorder %s91, %s105
      %p107 = scmp.eq.s32.totalorder %s25, 0
      %p108 = por %p106, %p107
      %s110 = sadd.s32 %s109, 1
      %p113 = scmp.eq.s32.totalorder %s19, 1
      %p114 = scmp.ne.s32.totalorder %s109, %s111
      %p115 = scmp.eq.s32.totalorder %s19, 0
      %p116 = por %p114, %p115
      %p117 = scmp.ne.s32.totalorder %s109, %s111
      %p118 = scmp.eq.s32.totalorder %s24, 1
      %p119 = por %p117, %p118
      %p120 = scmp.ne.s32.totalorder %s111, %s112
      %p121 = scmp.eq.s32.totalorder %s24, 0
      %p122 = por %p120, %p121
      %p123 = scmp.ne.s32.totalorder %s111, %s112
      %p124 = scmp.eq.s32.totalorder %s25, 1
      %p125 = por %p123, %p124
      %p127 = scmp.ne.s32.totalorder %s112, %s126
      %p128 = scmp.eq.s32.totalorder %s25, 0
      %p129 = por %p127, %p128
      %s131 = sadd.s32 %s130, 1
      %p134 = scmp.eq.s32.totalorder %s19, 1
      %p135 = scmp.ne.s32.totalorder %s130, %s132
      %p136 = scmp.eq.s32.totalorder %s19, 0
      %p137 = por %p135, %p136
      %p138 = scmp.ne.s32.totalorder %s130, %s132
      %p139 = scmp.eq.s32.totalorder %s24, 1
      %p140 = por %p138, %p139
      %p141 = scmp.ne.s32.totalorder %s132, %s133
      %p142 = scmp.eq.s32.totalorder %s24, 0
      %p143 = por %p141, %p142
      %p144 = scmp.ne.s32.totalorder %s132, %s133
      %p145 = scmp.eq.s32.totalorder %s25, 1
      %p146 = por %p144, %p145
      %p148 = scmp.ne.s32.totalorder %s133, %s147
      %p149 = scmp.eq.s32.totalorder %s25, 0
      %p150 = por %p148, %p149
      %s151 = ssub.s32 %s26, %s38
      %p152 = scmp.eq.s32.totalorder %s151, 0
      %s154 = sadd.s32 %s153, 1
      %s155 = scalar_select %p152, %s153, %s154
      %p158 = pneg %p152
      %p159 = scmp.eq.s32.totalorder %s19, 1
      %p160 = por %p158, %p159
      %p161 = scmp.ne.s32.totalorder %s153, %s156
      %p162 = scmp.eq.s32.totalorder %s19, 0
      %p163 = por %p161, %p162
      %p164 = scmp.ne.s32.totalorder %s153, %s156
      %p165 = scmp.eq.s32.totalorder %s24, 1
      %p166 = por %p164, %p165
      %p167 = scmp.ne.s32.totalorder %s156, %s157
      %p168 = scmp.eq.s32.totalorder %s24, 0
      %p169 = por %p167, %p168
      %p170 = scmp.ne.s32.totalorder %s156, %s157
      %p171 = scmp.eq.s32.totalorder %s25, 1
      %p172 = por %p170, %p171
      %p174 = scmp.ne.s32.totalorder %s157, %s173
      %p175 = scmp.eq.s32.totalorder %s25, 0
      %p176 = por %p174, %p175
      %p177 = scmp.le.s32.totalorder 1, %s19
      %p178 = scmp.lt.s32.totalorder %s19, 3
      %p179 = pnand %p177, %p178
      %p180 = pneg %p179
      // Predicated region
      $region9: #{tpu_custom_call.1} parent=5 // pred_check
        _
      $region10: #{tpu_custom_call.1} parent=5 // pred_check_branch
        %182 = sbr.rel (%p179) target = $region12
      $region11: #{tpu_custom_call.1} parent=5 // pred_region
        %s183 = ssub.s32 %s19, 1
        // Predicated region
        $region13: #{tpu_custom_call.1} parent=11 // pred_check
          %p184 = pneg %p80
        $region14: #{tpu_custom_call.1} parent=11 // pred_check_branch
          %186 = sbr.rel (%p184) target = $region16
        $region15: #{tpu_custom_call.1} parent=11 // pred_region
          %188 = vsyncadd [#allocation7], 0
          %s189 = sshll.u32 %s1, 4
          %s190 = int_to_ptr.hbm [resolvable:$true] %s189
          %s191 = sshll.u32 [#allocation6], 4
          %s192 = int_to_ptr.vmem [resolvable:$true] %s191
          %197 = dma.hbm_to_vmem [thread:$0]  %s190, 1024, %s192, [#allocation7], 64, 64, 4
        $region16: #{tpu_custom_call.1} parent=11 // pred_fallthru
          _
        // Predicated region
        $region17: #{tpu_custom_call.1} parent=11 // pred_check
          %p198 = pneg %p101
        $region18: #{tpu_custom_call.1} parent=11 // pred_check_branch
          %200 = sbr.rel (%p198) target = $region20
        $region19: #{tpu_custom_call.1} parent=11 // pred_region
          _
        $region20: #{tpu_custom_call.1} parent=11 // pred_fallthru
          _
        // Predicated region
        $region21: #{tpu_custom_call.1} parent=11 // pred_check
          %p201 = pneg %p122
        $region22: #{tpu_custom_call.1} parent=11 // pred_check_branch
          %203 = sbr.rel (%p201) target = $region24
        $region23: #{tpu_custom_call.1} parent=11 // pred_region
          %205 = vsyncadd [#allocation7], 0
          %s206 = sshll.u32 %s3, 4
          %s207 = int_to_ptr.hbm [resolvable:$true] %s206
          %s208 = sshll.u32 [#allocation8], 4
          %s209 = int_to_ptr.vmem [resolvable:$true] %s208
          %214 = dma.hbm_to_vmem [thread:$0]  %s207, 1024, %s209, [#allocation7], 64, 64, 4
        $region24: #{tpu_custom_call.1} parent=11 // pred_fallthru
          _
        // Predicated region
        $region25: #{tpu_custom_call.1} parent=11 // pred_check
          %p215 = pneg %p143
        $region26: #{tpu_custom_call.1} parent=11 // pred_check_branch
          %217 = sbr.rel (%p215) target = $region28
        $region27: #{tpu_custom_call.1} parent=11 // pred_region
          %219 = vsyncadd [#allocation10], 0
          %s220 = sshll.u32 %s4, 4
          %s221 = int_to_ptr.hbm [resolvable:$true] %s220
          %s222 = sshll.u32 [#allocation9], 4
          %s223 = int_to_ptr.vmem [resolvable:$true] %s222
          %228 = dma.hbm_to_vmem [thread:$0]  %s221, 1024, %s223, [#allocation10], 64, 64, 4
        $region28: #{tpu_custom_call.1} parent=11 // pred_fallthru
          _
      $region12: #{tpu_custom_call.1} parent=5 // pred_fallthru
        _
      %p229 = scmp.lt.s32.totalorder %s19, 2
      // Predicated region
      $region29: #{tpu_custom_call.1} parent=5 // pred_check
        %p230 = pneg %p229
      $region30: #{tpu_custom_call.1} parent=5 // pred_check_branch
        %232 = sbr.rel (%p230) target = $region32
      $region31: #{tpu_custom_call.1} parent=5 // pred_region
        // Predicated region
        $region33: #{tpu_custom_call.1} parent=31 // pred_check
          %p233 = pneg %p53
        $region34: #{tpu_custom_call.1} parent=31 // pred_check_branch
          %235 = sbr.rel (%p233) target = $region36
        $region35: #{tpu_custom_call.1} parent=31 // pred_region
          %s236 = sand.u32 %s43, 1
          %s237 = scalar_lea.sflag [#allocation4], %s236
          %s238 = sand.u32 %s43, 1
          %s239 = smul.addr %s238, 32
          %s240 = scalar_lea.vmem [#allocation3], %s239
          %s241 = smul.u32 8, %s26
          %243 = vsyncadd %s237, 0
          %s244 = sadd.s32 %s27, %s241
          %s245 = smul.addr %s244, 4
          %s246 = scalar_lea.hbm %s0, %s245
          %s247 = sshll.u32 %s246, 4
          %s248 = int_to_ptr.hbm [resolvable:$true] %s247
          %s249 = sshll.u32 %s240, 4
          %s250 = int_to_ptr.vmem [resolvable:$true] %s249
          %255 = dma.hbm_to_vmem [thread:$0]  %s248, 512, %s250, %s237, 64, 64, 4
        $region36: #{tpu_custom_call.1} parent=31 // pred_fallthru
          _
      $region32: #{tpu_custom_call.1} parent=5 // pred_fallthru
        _
      %p256 = scmp.le.s32.totalorder 1, %s19
      %p257 = scmp.lt.s32.totalorder %s19, 3
      %p258 = pnand %p256, %p257
      %p259 = pneg %p258
      // Predicated region
      $region37: #{tpu_custom_call.1} parent=5 // pred_check
        _
      $region38: #{tpu_custom_call.1} parent=5 // pred_check_branch
        %261 = sbr.rel (%p258) target = $region40
      $region39: #{tpu_custom_call.1} parent=5 // pred_region
        %s262 = ssub.s32 %s19, 1
        %s263 = sand.u32 %s46, 1
        %s264 = scalar_lea.sflag [#allocation4], %s263
        %s265 = sand.u32 %s46, 1
        %s266 = smul.addr %s265, 32
        %s267 = scalar_lea.vmem [#allocation3], %s266
        // Predicated region
        $region41: #{tpu_custom_call.1} parent=39 // pred_check
          %p268 = pneg %p59
        $region42: #{tpu_custom_call.1} parent=39 // pred_check_branch
          %270 = sbr.rel (%p268) target = $region44
        $region43: #{tpu_custom_call.1} parent=39 // pred_region
          %272 = dma.done %s264, 512
        $region44: #{tpu_custom_call.1} parent=39 // pred_fallthru
          _
        // Predicated region
        $region45: #{tpu_custom_call.1} parent=39 // pred_check
          %p273 = pneg %p80
        $region46: #{tpu_custom_call.1} parent=39 // pred_check_branch
          %275 = sbr.rel (%p273) target = $region48
        $region47: #{tpu_custom_call.1} parent=39 // pred_region
          %277 = dma.done [#allocation7], 1024
        $region48: #{tpu_custom_call.1} parent=39 // pred_fallthru
          _
        // Predicated region
        $region49: #{tpu_custom_call.1} parent=39 // pred_check
          %p278 = pneg %p122
        $region50: #{tpu_custom_call.1} parent=39 // pred_check_branch
          %280 = sbr.rel (%p278) target = $region52
        $region51: #{tpu_custom_call.1} parent=39 // pred_region
          %282 = dma.done [#allocation7], 1024
        $region52: #{tpu_custom_call.1} parent=39 // pred_fallthru
          _
        // Predicated region
        $region53: #{tpu_custom_call.1} parent=39 // pred_check
          %p283 = pneg %p143
        $region54: #{tpu_custom_call.1} parent=39 // pred_check_branch
          %285 = sbr.rel (%p283) target = $region56
        $region55: #{tpu_custom_call.1} parent=39 // pred_region
          %287 = dma.done [#allocation10], 1024
        $region56: #{tpu_custom_call.1} parent=39 // pred_fallthru
          _
        %s288 = sand.u32 %s46, 1
        %s289 = scalar_lea.sflag [#allocation4], %s288
        %s290 = sand.u32 %s46, 1
        %s291 = smul.addr %s290, 32
        %s292 = scalar_lea.vmem [#allocation3], %s291
        %p293 = pneg %p59
        %p294 = pneg %p56
        %p295 = pneg %p80
        %p296 = pneg %p77
        %p297 = pneg %p101
        %p298 = pneg %p98
        %p299 = pneg %p122
        %p300 = pneg %p119
        %p301 = pneg %p143
        %p302 = pneg %p140
        %p303 = pneg %p169
        %p304 = pneg %p166
        %s305 = sand.u32 %s156, 1
        %s306 = scalar_lea.sflag [#allocation5], %s305
        %s307 = sand.u32 %s156, 1
        %s308 = smul.addr %s307, 32
        %s309 = scalar_lea.vmem [#allocation11], %s308
        %s310 = smul.u32 8, %s28
        %s311 = smul.u32 8, %s28
        %p312 = scmp.eq.s32.totalorder %s29, 0
        // Predicated region
        $region57: #{tpu_custom_call.1} parent=39 // pred_check
          %p313 = pneg %p312
        $region58: #{tpu_custom_call.1} parent=39 // pred_check_branch
          %315 = sbr.rel (%p313) target = $region60
        $region59: #{tpu_custom_call.1} parent=39 // pred_region
          %316 = vst [vmem:[#allocation2] sm:$0xff] 0.0
          %317 = vst [vmem:[#allocation2 + $0x8] sm:$0xff] 0.0
          %318 = vst [vmem:[#allocation2 + $0x10] sm:$0xff] 0.0
          %319 = vst [vmem:[#allocation2 + $0x18] sm:$0xff] 0.0
          %320 = vst [vmem:[#allocation2 + $0x20] sm:$0xff] 0.0
          %321 = vst [vmem:[#allocation2 + $0x28] sm:$0xff] 0.0
          %322 = vst [vmem:[#allocation2 + $0x30] sm:$0xff] 0.0
          %323 = vst [vmem:[#allocation2 + $0x38] sm:$0xff] 0.0
        $region60: #{tpu_custom_call.1} parent=39 // pred_fallthru
          _
        %s324 = smul.u32 %s29, 128
        %s325 = sshra.s32 %s324, 3
        %s326 = sand.u32 %s324, 7
        %s327 = smul.addr %s325, 4
        %s328 = scalar_lea.vmem [#allocation6], %s327
        %v329 = vld [vmem:[%s328] sm:$0xf]
        %v330 = vld [vmem:[%s328 + $0x4] sm:$0xf]
        %v331 = vld [vmem:[%s328 + $0x8] sm:$0xf]
        %v332 = vld [vmem:[%s328 + $0xc] sm:$0xf]
        %v333 = vld [vmem:[%s328 + $0x10] sm:$0xf]
        %v334 = vld [vmem:[%s328 + $0x14] sm:$0xf]
        %v335 = vld [vmem:[%s328 + $0x18] sm:$0xf]
        %v336 = vld [vmem:[%s328 + $0x1c] sm:$0xf]
        %v337 = vld [vmem:[%s328 + $0x20] sm:$0xf]
        %v338 = vld [vmem:[%s328 + $0x24] sm:$0xf]
        %v339 = vld [vmem:[%s328 + $0x28] sm:$0xf]
        %v340 = vld [vmem:[%s328 + $0x2c] sm:$0xf]
        %v341 = vld [vmem:[%s328 + $0x30] sm:$0xf]
        %v342 = vld [vmem:[%s328 + $0x34] sm:$0xf]
        %v343 = vld [vmem:[%s328 + $0x38] sm:$0xf]
        %v344 = vld [vmem:[%s328 + $0x3c] sm:$0xf]
        %v345 = vld [vmem:[#allocation2] sm:$0xff]
        %v346 = vld [vmem:[#allocation2 + $0x8] sm:$0xff]
        %v347 = vld [vmem:[#allocation2 + $0x10] sm:$0xff]
        %v348 = vld [vmem:[#allocation2 + $0x18] sm:$0xff]
        %v349 = vld [vmem:[#allocation2 + $0x20] sm:$0xff]
        %v350 = vld [vmem:[#allocation2 + $0x28] sm:$0xff]
        %v351 = vld [vmem:[#allocation2 + $0x30] sm:$0xff]
        %v352 = vld [vmem:[#allocation2 + $0x38] sm:$0xff]
        %v353 = vld [vmem:[%s267] sm:$0xf]
        %v354 = vld [vmem:[%s267 + $0x4] sm:$0xf]
        %v355 = vld [vmem:[%s267 + $0x8] sm:$0xf]
        %v356 = vld [vmem:[%s267 + $0xc] sm:$0xf]
        %v357 = vld [vmem:[%s267 + $0x10] sm:$0xf]
        %v358 = vld [vmem:[%s267 + $0x14] sm:$0xf]
        %v359 = vld [vmem:[%s267 + $0x18] sm:$0xf]
        %v360 = vld [vmem:[%s267 + $0x1c] sm:$0xf]
        %v369 = vunpack.c.l.b16 %v353
        %v370 = vunpack.c.l.b16 %v354
        %v371 = vunpack.c.l.b16 %v355
        %v372 = vunpack.c.l.b16 %v356
        %v373 = vunpack.c.l.b16 %v357
        %v374 = vunpack.c.l.b16 %v358
        %v375 = vunpack.c.l.b16 %v359
        %v376 = vunpack.c.l.b16 %v360
        %v377 = vpack.c.b16 %v370, %v369
        %v378 = vpack.c.b16 %v372, %v371
        %v379 = vpack.c.b16 %v374, %v373
        %v380 = vpack.c.b16 %v376, %v375
        %v401 = vunpack.c.l.b16 %v329
        %v402 = vunpack.c.l.b16 %v330
        %v403 = vunpack.c.l.b16 %v331
        %v404 = vunpack.c.l.b16 %v332
        %v405 = vunpack.c.l.b16 %v333
        %v406 = vunpack.c.l.b16 %v334
        %v407 = vunpack.c.l.b16 %v335
        %v408 = vunpack.c.l.b16 %v336
        %v409 = vunpack.c.l.b16 %v337
        %v410 = vunpack.c.l.b16 %v338
        %v411 = vunpack.c.l.b16 %v339
        %v412 = vunpack.c.l.b16 %v340
        %v413 = vunpack.c.l.b16 %v341
        %v414 = vunpack.c.l.b16 %v342
        %v415 = vunpack.c.l.b16 %v343
        %v416 = vunpack.c.l.b16 %v344
        %v417 = vpack.c.b16 %v402, %v401
        %v418 = vpack.c.b16 %v404, %v403
        %v419 = vpack.c.b16 %v406, %v405
        %v420 = vpack.c.b16 %v408, %v407
        %v421 = vpack.c.b16 %v410, %v409
        %v422 = vpack.c.b16 %v412, %v411
        %v423 = vpack.c.b16 %v414, %v413
        %v424 = vpack.c.b16 %v416, %v415
        %433 = vmatpush.bf16.msra.mxu0 %v424
        %434 = vmatpush.bf16.msra.mxu0 %v423
        %435 = vmatpush.bf16.msra.mxu0 %v422
        %436 = vmatpush.bf16.msra.mxu0 %v421
        %437 = vmatpush.bf16.msra.mxu0 %v420
        %438 = vmatpush.bf16.msra.mxu0 %v419
        %439 = vmatpush.bf16.msra.mxu0 %v418
        %440 = vmatpush.bf16.msra.mxu0 %v417
        %441 = vmatmul.bf16.gmra.mxu0 %v377
        %v442 = vpop.f32.mrf.mxu0
        %v443 = vadd.f32 0.0, %v442
        %v444 = vpop.f32.mrf.mxu0
        %v445 = vadd.f32 0.0, %v444
        %446 = vmatmul.bf16.gmra.mxu0 %v378
        %v447 = vpop.f32.mrf.mxu0
        %v448 = vadd.f32 0.0, %v447
        %v449 = vpop.f32.mrf.mxu0
        %v450 = vadd.f32 0.0, %v449
        %451 = vmatmul.bf16.gmra.mxu0 %v379
        %v452 = vpop.f32.mrf.mxu0
        %v453 = vadd.f32 0.0, %v452
        %v454 = vpop.f32.mrf.mxu0
        %v455 = vadd.f32 0.0, %v454
        %456 = vmatmul.bf16.gmra.mxu0 %v380
        %v457 = vpop.f32.mrf.mxu0
        %v458 = vadd.f32 0.0, %v457
        %v459 = vpop.f32.mrf.mxu0
        %v460 = vadd.f32 0.0, %v459
        %461 = vdwg.mxu0
        %v462 = vadd.f32 %v345, %v443
        %v463 = vadd.f32 %v346, %v445
        %v464 = vadd.f32 %v347, %v448
        %v465 = vadd.f32 %v348, %v450
        %v466 = vadd.f32 %v349, %v453
        %v467 = vadd.f32 %v350, %v455
        %v468 = vadd.f32 %v351, %v458
        %v469 = vadd.f32 %v352, %v460
        %470 = vst [vmem:[#allocation2] sm:$0xff] %v462
        %471 = vst [vmem:[#allocation2 + $0x8] sm:$0xff] %v463
        %472 = vst [vmem:[#allocation2 + $0x10] sm:$0xff] %v464
        %473 = vst [vmem:[#allocation2 + $0x18] sm:$0xff] %v465
        %474 = vst [vmem:[#allocation2 + $0x20] sm:$0xff] %v466
        %475 = vst [vmem:[#allocation2 + $0x28] sm:$0xff] %v467
        %476 = vst [vmem:[#allocation2 + $0x30] sm:$0xff] %v468
        %477 = vst [vmem:[#allocation2 + $0x38] sm:$0xff] %v469
        // Predicated region
        $region61: #{tpu_custom_call.1} parent=39 // pred_check
          %p478 = pneg %p312
        $region62: #{tpu_custom_call.1} parent=39 // pred_check_branch
          %480 = sbr.rel (%p478) target = $region64
        $region63: #{tpu_custom_call.1} parent=39 // pred_region
          %v481 = vld [vmem:[#allocation2] sm:$0xff]
          %v482 = vld [vmem:[#allocation2 + $0x8] sm:$0xff]
          %v483 = vld [vmem:[#allocation2 + $0x10] sm:$0xff]
          %v484 = vld [vmem:[#allocation2 + $0x18] sm:$0xff]
          %v485 = vld [vmem:[#allocation2 + $0x20] sm:$0xff]
          %v486 = vld [vmem:[#allocation2 + $0x28] sm:$0xff]
          %v487 = vld [vmem:[#allocation2 + $0x30] sm:$0xff]
          %v488 = vld [vmem:[#allocation2 + $0x38] sm:$0xff]
          %v489 = vpack.c.bf16 %v482, %v481
          %v490 = vpack.c.bf16 %v484, %v483
          %v491 = vpack.c.bf16 %v486, %v485
          %v492 = vpack.c.bf16 %v488, %v487
          %v493 = vld [vmem:[#allocation8] sm:$0xf]
          %v494 = vld [vmem:[#allocation8 + $0x4] sm:$0xf]
          %v495 = vld [vmem:[#allocation8 + $0x8] sm:$0xf]
          %v496 = vld [vmem:[#allocation8 + $0xc] sm:$0xf]
          %v497 = vld [vmem:[#allocation8 + $0x10] sm:$0xf]
          %v498 = vld [vmem:[#allocation8 + $0x14] sm:$0xf]
          %v499 = vld [vmem:[#allocation8 + $0x18] sm:$0xf]
          %v500 = vld [vmem:[#allocation8 + $0x1c] sm:$0xf]
          %v501 = vld [vmem:[#allocation8 + $0x20] sm:$0xf]
          %v502 = vld [vmem:[#allocation8 + $0x24] sm:$0xf]
          %v503 = vld [vmem:[#allocation8 + $0x28] sm:$0xf]
          %v504 = vld [vmem:[#allocation8 + $0x2c] sm:$0xf]
          %v505 = vld [vmem:[#allocation8 + $0x30] sm:$0xf]
          %v506 = vld [vmem:[#allocation8 + $0x34] sm:$0xf]
          %v507 = vld [vmem:[#allocation8 + $0x38] sm:$0xf]
          %v508 = vld [vmem:[#allocation8 + $0x3c] sm:$0xf]
          %v509 = vld [vmem:[%s2] sm:$0x1]
          %v511 = vperm.slane %v509, 0
          %v529 = vunpack.c.l.b16 %v493
          %v530 = vunpack.c.l.b16 %v494
          %v531 = vunpack.c.l.b16 %v495
          %v532 = vunpack.c.l.b16 %v496
          %v533 = vunpack.c.l.b16 %v497
          %v534 = vunpack.c.l.b16 %v498
          %v535 = vunpack.c.l.b16 %v499
          %v536 = vunpack.c.l.b16 %v500
          %v537 = vunpack.c.l.b16 %v501
          %v538 = vunpack.c.l.b16 %v502
          %v539 = vunpack.c.l.b16 %v503
          %v540 = vunpack.c.l.b16 %v504
          %v541 = vunpack.c.l.b16 %v505
          %v542 = vunpack.c.l.b16 %v506
          %v543 = vunpack.c.l.b16 %v507
          %v544 = vunpack.c.l.b16 %v508
          %v545 = vpack.c.b16 %v530, %v529
          %v546 = vpack.c.b16 %v532, %v531
          %v547 = vpack.c.b16 %v534, %v533
          %v548 = vpack.c.b16 %v536, %v535
          %v549 = vpack.c.b16 %v538, %v537
          %v550 = vpack.c.b16 %v540, %v539
          %v551 = vpack.c.b16 %v542, %v541
          %v552 = vpack.c.b16 %v544, %v543
          %561 = vmatpush.bf16.msra.mxu0 %v552
          %562 = vmatpush.bf16.msra.mxu0 %v551
          %563 = vmatpush.bf16.msra.mxu0 %v550
          %564 = vmatpush.bf16.msra.mxu0 %v549
          %565 = vmatpush.bf16.msra.mxu0 %v548
          %566 = vmatpush.bf16.msra.mxu0 %v547
          %567 = vmatpush.bf16.msra.mxu0 %v546
          %568 = vmatpush.bf16.msra.mxu0 %v545
          %569 = vmatmul.bf16.gmra.mxu0 %v489
          %v570 = vpop.f32.mrf.mxu0
          %v571 = vadd.f32 %v511, %v570
          %v572 = vpop.f32.mrf.mxu0
          %v573 = vadd.f32 %v511, %v572
          %574 = vmatmul.bf16.gmra.mxu0 %v490
          %v575 = vpop.f32.mrf.mxu0
          %v576 = vadd.f32 %v511, %v575
          %v577 = vpop.f32.mrf.mxu0
          %v578 = vadd.f32 %v511, %v577
          %579 = vmatmul.bf16.gmra.mxu0 %v491
          %v580 = vpop.f32.mrf.mxu0
          %v581 = vadd.f32 %v511, %v580
          %v582 = vpop.f32.mrf.mxu0
          %v583 = vadd.f32 %v511, %v582
          %584 = vmatmul.bf16.gmra.mxu0 %v492
          %v585 = vpop.f32.mrf.mxu0
          %v586 = vadd.f32 %v511, %v585
          %v587 = vpop.f32.mrf.mxu0
          %v588 = vadd.f32 %v511, %v587
          %589 = vdwg.mxu0
          %v590 = vmax.f32 %v571, 0.0
          %v591 = vmax.f32 %v573, 0.0
          %v592 = vmax.f32 %v576, 0.0
          %v593 = vmax.f32 %v578, 0.0
          %v594 = vmax.f32 %v581, 0.0
          %v595 = vmax.f32 %v583, 0.0
          %v596 = vmax.f32 %v586, 0.0
          %v597 = vmax.f32 %v588, 0.0
          %v598 = vpack.c.bf16 %v591, %v590
          %v599 = vpack.c.bf16 %v593, %v592
          %v600 = vpack.c.bf16 %v595, %v594
          %v601 = vpack.c.bf16 %v597, %v596
          %v602 = vld [vmem:[#allocation9] sm:$0xf]
          %v603 = vld [vmem:[#allocation9 + $0x4] sm:$0xf]
          %v604 = vld [vmem:[#allocation9 + $0x8] sm:$0xf]
          %v605 = vld [vmem:[#allocation9 + $0xc] sm:$0xf]
          %v606 = vld [vmem:[#allocation9 + $0x10] sm:$0xf]
          %v607 = vld [vmem:[#allocation9 + $0x14] sm:$0xf]
          %v608 = vld [vmem:[#allocation9 + $0x18] sm:$0xf]
          %v609 = vld [vmem:[#allocation9 + $0x1c] sm:$0xf]
          %v610 = vld [vmem:[#allocation9 + $0x20] sm:$0xf]
          %v611 = vld [vmem:[#allocation9 + $0x24] sm:$0xf]
          %v612 = vld [vmem:[#allocation9 + $0x28] sm:$0xf]
          %v613 = vld [vmem:[#allocation9 + $0x2c] sm:$0xf]
          %v614 = vld [vmem:[#allocation9 + $0x30] sm:$0xf]
          %v615 = vld [vmem:[#allocation9 + $0x34] sm:$0xf]
          %v616 = vld [vmem:[#allocation9 + $0x38] sm:$0xf]
          %v617 = vld [vmem:[#allocation9 + $0x3c] sm:$0xf]
          %v634 = vunpack.c.l.b16 %v602
          %v635 = vunpack.c.l.b16 %v603
          %v636 = vunpack.c.l.b16 %v604
          %v637 = vunpack.c.l.b16 %v605
          %v638 = vunpack.c.l.b16 %v606
          %v639 = vunpack.c.l.b16 %v607
          %v640 = vunpack.c.l.b16 %v608
          %v641 = vunpack.c.l.b16 %v609
          %v642 = vunpack.c.l.b16 %v610
          %v643 = vunpack.c.l.b16 %v611
          %v644 = vunpack.c.l.b16 %v612
          %v645 = vunpack.c.l.b16 %v613
          %v646 = vunpack.c.l.b16 %v614
          %v647 = vunpack.c.l.b16 %v615
          %v648 = vunpack.c.l.b16 %v616
          %v649 = vunpack.c.l.b16 %v617
          %v650 = vpack.c.b16 %v635, %v634
          %v651 = vpack.c.b16 %v637, %v636
          %v652 = vpack.c.b16 %v639, %v638
          %v653 = vpack.c.b16 %v641, %v640
          %v654 = vpack.c.b16 %v643, %v642
          %v655 = vpack.c.b16 %v645, %v644
          %v656 = vpack.c.b16 %v647, %v646
          %v657 = vpack.c.b16 %v649, %v648
          %666 = vmatpush.bf16.msra.mxu0 %v657
          %667 = vmatpush.bf16.msra.mxu0 %v656
          %668 = vmatpush.bf16.msra.mxu0 %v655
          %669 = vmatpush.bf16.msra.mxu0 %v654
          %670 = vmatpush.bf16.msra.mxu0 %v653
          %671 = vmatpush.bf16.msra.mxu0 %v652
          %672 = vmatpush.bf16.msra.mxu0 %v651
          %673 = vmatpush.bf16.msra.mxu0 %v650
          %674 = vmatmul.bf16.gmra.mxu0 %v598
          %v675 = vpop.f32.mrf.mxu0
          %v676 = vadd.f32 0.0, %v675
          %v677 = vpop.f32.mrf.mxu0
          %v678 = vadd.f32 0.0, %v677
          %679 = vmatmul.bf16.gmra.mxu0 %v599
          %v680 = vpop.f32.mrf.mxu0
          %v681 = vadd.f32 0.0, %v680
          %v682 = vpop.f32.mrf.mxu0
          %v683 = vadd.f32 0.0, %v682
          %684 = vmatmul.bf16.gmra.mxu0 %v600
          %v685 = vpop.f32.mrf.mxu0
          %v686 = vadd.f32 0.0, %v685
          %v687 = vpop.f32.mrf.mxu0
          %v688 = vadd.f32 0.0, %v687
          %689 = vmatmul.bf16.gmra.mxu0 %v601
          %v690 = vpop.f32.mrf.mxu0
          %v691 = vadd.f32 0.0, %v690
          %v692 = vpop.f32.mrf.mxu0
          %v693 = vadd.f32 0.0, %v692
          %694 = vdwg.mxu0
          %v695 = vpack.c.bf16 %v676, %v676
          %v696 = vpack.c.bf16 %v678, %v678
          %v697 = vpack.c.bf16 %v681, %v681
          %v698 = vpack.c.bf16 %v683, %v683
          %v699 = vpack.c.bf16 %v686, %v686
          %v700 = vpack.c.bf16 %v688, %v688
          %v701 = vpack.c.bf16 %v691, %v691
          %v702 = vpack.c.bf16 %v693, %v693
          %703 = vst [vmem:[%s309] sm:$0xf] %v695
          %704 = vst [vmem:[%s309 + $0x4] sm:$0xf] %v696
          %705 = vst [vmem:[%s309 + $0x8] sm:$0xf] %v697
          %706 = vst [vmem:[%s309 + $0xc] sm:$0xf] %v698
          %707 = vst [vmem:[%s309 + $0x10] sm:$0xf] %v699
          %708 = vst [vmem:[%s309 + $0x14] sm:$0xf] %v700
          %709 = vst [vmem:[%s309 + $0x18] sm:$0xf] %v701
          %710 = vst [vmem:[%s309 + $0x1c] sm:$0xf] %v702
        $region64: #{tpu_custom_call.1} parent=39 // pred_fallthru
          _
        %s711 = sand.u32 %s156, 1
        %s712 = scalar_lea.sflag [#allocation5], %s711
        %s713 = sand.u32 %s156, 1
        %s714 = smul.addr %s713, 32
        %s715 = scalar_lea.vmem [#allocation11], %s714
        // Predicated region
        $region65: #{tpu_custom_call.1} parent=39 // pred_check
          %p716 = pneg %p166
        $region66: #{tpu_custom_call.1} parent=39 // pred_check_branch
          %718 = sbr.rel (%p716) target = $region68
        $region67: #{tpu_custom_call.1} parent=39 // pred_region
          %s719 = smul.u32 8, %s28
          %721 = vsyncadd %s712, 0
          %s722 = smul.addr %s719, 4
          %s723 = scalar_lea.hbm %s5, %s722
          %s724 = sshll.u32 %s715, 4
          %s725 = int_to_ptr.vmem [resolvable:$true] %s724
          %s726 = sshll.u32 %s723, 4
          %s727 = int_to_ptr.hbm [resolvable:$true] %s726
          %732 = dma.vmem_to_hbm [thread:$0]  %s725, 512, %s727, %s712, 64, 64, 4
        $region68: #{tpu_custom_call.1} parent=39 // pred_fallthru
          _
      $region40: #{tpu_custom_call.1} parent=5 // pred_fallthru
        _
      %p733 = scmp.le.s32.totalorder 2, %s19
      // Predicated region
      $region69: #{tpu_custom_call.1} parent=5 // pred_check
        %p734 = pneg %p733
      $region70: #{tpu_custom_call.1} parent=5 // pred_check_branch
        %736 = sbr.rel (%p734) target = $region72
      $region71: #{tpu_custom_call.1} parent=5 // pred_region
        %s737 = ssub.s32 %s19, 2
        // Predicated region
        $region73: #{tpu_custom_call.1} parent=71 // pred_check
          %p738 = pneg %p172
        $region74: #{tpu_custom_call.1} parent=71 // pred_check_branch
          %740 = sbr.rel (%p738) target = $region76
        $region75: #{tpu_custom_call.1} parent=71 // pred_region
          %s741 = sand.u32 %s157, 1
          %s742 = scalar_lea.sflag [#allocation5], %s741
          %s743 = sand.u32 %s157, 1
          %s744 = smul.addr %s743, 32
          %s745 = scalar_lea.vmem [#allocation11], %s744
          %747 = dma.done %s742, 512
        $region76: #{tpu_custom_call.1} parent=71 // pred_fallthru
          _
      $region72: #{tpu_custom_call.1} parent=5 // pred_fallthru
        _
    $region6: #{tpu_custom_call.1} parent=1 // loop_footer
      %s23 = sadd.s32 1, %s19
    $region7: #{tpu_custom_call.1} parent=1 // loop_footer_branch
      %18 = sbr.rel target = $region3
    $region8: #{tpu_custom_call.1} parent=1 // loop_exit
      _
    %748 = vsyncpa [#allocation4], 1
    %s749 = scalar_lea.sflag [#allocation4], 1
    %750 = vsyncpa %s749, 1
    %751 = vsyncpa [#allocation7], 1
    %752 = vsyncpa [#allocation10], 1
    %753 = vsyncpa [#allocation5], 1
    %s754 = scalar_lea.sflag [#allocation5], 1
    %755 = vsyncpa %s754, 1

</llo_original>
